<compile_context>
chip_gen: v7x
topology: tpu7x:2x2x1
jax: 0.10.0
libtpu: 0.0.40
codegen_flags: <defaults>
</compile_context>

<pallas_src>
import functools

import jax
import jax.numpy as jnp
from jax.experimental import pallas as pl
from jax.experimental.pallas import tpu as pltpu

LEAKY_SLOPE = 0.01  # PyTorch nn.LeakyReLU default negative_slope


def _round_up(n: int, m: int) -> int:
    return ((n + m - 1) // m) * m


def _mlp_fused_kernel(x_ref, *refs, n_layers: int, last_relu: bool):
    """Fused MLP forward.

    refs = (w0, b0, w1, b1, ..., w_{L-1}, b_{L-1}, o_ref)
    x_ref: [Bp, D0p]   w_i: [D_ip, D_{i+1}p]   b_i: [1, D_{i+1}p]   o_ref: [Bp, DLp]
    All shapes are already (8, 128)-aligned; intermediate activations never
    leave on-chip memory.
    """
    o_ref = refs[-1]
    wb_refs = refs[:-1]

    h = x_ref[...]
    for i in range(n_layers):
        w = wb_refs[2 * i][...]
        b = wb_refs[2 * i + 1][...]
        y = jnp.dot(h, w, preferred_element_type=jnp.float32) + b
        apply_act = (i < n_layers - 1) or last_relu
        if apply_act:
            # LeakyReLU(y) == max(y, slope*y) for 0 < slope < 1.
            y = jnp.maximum(y, LEAKY_SLOPE * y)
        h = y
    o_ref[...] = h.astype(o_ref.dtype)


def mlp_forward(params, x, last_relu: bool = False):
    """Replicates MLP.forward:
       Linear -> LeakyReLU -> [Linear -> LeakyReLU]* -> Linear (-> LeakyReLU if last_relu)

    params: list of (w [in, out], b [out]) in float32.
    x: [batch, input_layer_size] float32.
    """
    n_layers = len(params)
    batch, din = x.shape
    assert din == params[0][0].shape[0]

    # Logical and padded feature dims for every layer boundary.
    dims = [din] + [w.shape[1] for (w, _) in params]
    dims_p = [_round_up(d, 128) for d in dims]
    batch_p = _round_up(batch, 8)

    # Zero-pad activations, weights and biases. Zero padding keeps the math
    # exact: padded input lanes multiply zero weight rows, padded output lanes
    # get zero weights + zero bias (and LeakyReLU(0) == 0 for deeper layers).
    x_p = jnp.zeros((batch_p, dims_p[0]), jnp.float32).at[:batch, :din].set(x)

    padded_wb = []
    for i, (w, b) in enumerate(params):
        fi, fo = w.shape
        w_p = jnp.zeros((dims_p[i], dims_p[i + 1]), jnp.float32).at[:fi, :fo].set(w)
        b_p = jnp.zeros((1, dims_p[i + 1]), jnp.float32).at[0, :fo].set(b)
        padded_wb += [w_p, b_p]

    # TODO(synk): for realistic layer sizes (weights too big for VMEM) switch
    # to a K/N-tiled grid with an f32 accumulator scratch; at these MLP sizes
    # everything fits in VMEM as single full blocks.
    kernel = functools.partial(
        _mlp_fused_kernel, n_layers=n_layers, last_relu=last_relu
    )
    n_inputs = 1 + 2 * n_layers
    out_p = pl.pallas_call(
        kernel,
        out_shape=jax.ShapeDtypeStruct((batch_p, dims_p[-1]), jnp.float32),
        in_specs=[pl.BlockSpec(memory_space=pltpu.MemorySpace.VMEM)] * n_inputs,
        out_specs=pl.BlockSpec(memory_space=pltpu.MemorySpace.VMEM),
    )(x_p, *padded_wb)

    # Slice off the padded rows/lanes.
    return out_p[:batch, : dims[-1]]


def init_mlp_params(key, input_layer_size, hidden_layers):
    """Deterministic init mimicking nn.Linear default (uniform +/- 1/sqrt(fan_in))."""
    sizes = [input_layer_size] + list(hidden_layers)
    params = []
    for i in range(len(sizes) - 1):
        fan_in, fan_out = sizes[i], sizes[i + 1]
        key, kw, kb = jax.random.split(key, 3)
        bound = 1.0 / (fan_in ** 0.5)
        # stored as [in, out] so the kernel computes x @ W
        w = jax.random.uniform(kw, (fan_in, fan_out), jnp.float32, -bound, bound)
        b = jax.random.uniform(kb, (fan_out,), jnp.float32, -bound, bound)
        params.append((w, b))
    return params


def _mlp_reference(params, x, last_relu=False):
    """Pure-JAX reference for correctness checking."""
    n_layers = len(params)
    for idx, (w, b) in enumerate(params):
        x = (
            jnp.dot(x, w, precision=jax.lax.Precision.HIGHEST)
            + b[None, :]
        )
        if (idx < n_layers - 1) or last_relu:
            x = jnp.maximum(x, LEAKY_SLOPE * x)
    return x


if __name__ == "__main__":
    key = jax.random.PRNGKey(0)
    key, kx, kp = jax.random.split(key, 3)

    batch = 2
    input_layer_size = 32
    hidden_layers = [32, 64, 16]  # last entry = output size
    last_relu = False

    x = jax.random.normal(kx, (batch, input_layer_size), jnp.float32)
    params = init_mlp_params(kp, input_layer_size, hidden_layers)

    out = mlp_forward(params, x, last_relu=last_relu)
    out = jax.block_until_ready(out)
    assert out.shape == (batch, hidden_layers[-1]), out.shape

    ref = jax.block_until_ready(_mlp_reference(params, x, last_relu=last_relu))
    assert jnp.allclose(out, ref, rtol=1e-3, atol=1e-3), (
        float(jnp.max(jnp.abs(out - ref)))
    )
    print("KERNEL_OK")
</pallas_src>

<mosaic_0001>
module attributes {stable_mosaic.version = 11 : i64} {
  func.func @_mlp_fused_kernel(%arg0: memref<8x128xf32, #tpu.memory_space<vmem>>, %arg1: memref<128x128xf32, #tpu.memory_space<vmem>>, %arg2: memref<1x128xf32, #tpu.memory_space<vmem>>, %arg3: memref<128x128xf32, #tpu.memory_space<vmem>>, %arg4: memref<1x128xf32, #tpu.memory_space<vmem>>, %arg5: memref<128x128xf32, #tpu.memory_space<vmem>>, %arg6: memref<1x128xf32, #tpu.memory_space<vmem>>, %arg7: memref<8x128xf32, #tpu.memory_space<vmem>>) attributes {dimension_semantics = [], scalar_prefetch = 0 : i64, scratch_operands = 0 : i64, tpu.core_type = #tpu.core_type<tc>} {
    %c0 = arith.constant 0 : index
    %c0_0 = arith.constant 0 : index
    %0 = vector.load %arg0[%c0, %c0_0] : memref<8x128xf32, #tpu.memory_space<vmem>>, vector<8x128xf32>
    %c0_1 = arith.constant 0 : index
    %c0_2 = arith.constant 0 : index
    %1 = vector.load %arg1[%c0_1, %c0_2] : memref<128x128xf32, #tpu.memory_space<vmem>>, vector<128x128xf32>
    %c0_3 = arith.constant 0 : index
    %c0_4 = arith.constant 0 : index
    %2 = vector.load %arg2[%c0_3, %c0_4] : memref<1x128xf32, #tpu.memory_space<vmem>>, vector<1x128xf32>
    %cst = arith.constant dense<0.000000e+00> : vector<8x128xf32>
    %3 = tpu.matmul %0, %1, %cst {dimension_numbers = #tpu.dot_dimension_numbers<[1], [0], [0], [1], [0, 0, 1, 1], [], []>} : vector<8x128xf32>, vector<128x128xf32>, vector<8x128xf32> -> vector<8x128xf32>
    %4 = vector.broadcast %2 : vector<1x128xf32> to vector<8x128xf32>
    %5 = arith.addf %3, %4 : vector<8x128xf32>
    %cst_5 = arith.constant 0.00999999977 : f32
    %6 = vector.broadcast %cst_5 : f32 to vector<8x128xf32>
    %7 = arith.mulf %6, %5 : vector<8x128xf32>
    %8 = arith.maximumf %5, %7 : vector<8x128xf32>
    %c0_6 = arith.constant 0 : index
    %c0_7 = arith.constant 0 : index
    %9 = vector.load %arg3[%c0_6, %c0_7] : memref<128x128xf32, #tpu.memory_space<vmem>>, vector<128x128xf32>
    %c0_8 = arith.constant 0 : index
    %c0_9 = arith.constant 0 : index
    %10 = vector.load %arg4[%c0_8, %c0_9] : memref<1x128xf32, #tpu.memory_space<vmem>>, vector<1x128xf32>
    %cst_10 = arith.constant dense<0.000000e+00> : vector<8x128xf32>
    %11 = tpu.matmul %8, %9, %cst_10 {dimension_numbers = #tpu.dot_dimension_numbers<[1], [0], [0], [1], [0, 0, 1, 1], [], []>} : vector<8x128xf32>, vector<128x128xf32>, vector<8x128xf32> -> vector<8x128xf32>
    %12 = vector.broadcast %10 : vector<1x128xf32> to vector<8x128xf32>
    %13 = arith.addf %11, %12 : vector<8x128xf32>
    %cst_11 = arith.constant 0.00999999977 : f32
    %14 = vector.broadcast %cst_11 : f32 to vector<8x128xf32>
    %15 = arith.mulf %14, %13 : vector<8x128xf32>
    %16 = arith.maximumf %13, %15 : vector<8x128xf32>
    %c0_12 = arith.constant 0 : index
    %c0_13 = arith.constant 0 : index
    %17 = vector.load %arg5[%c0_12, %c0_13] : memref<128x128xf32, #tpu.memory_space<vmem>>, vector<128x128xf32>
    %c0_14 = arith.constant 0 : index
    %c0_15 = arith.constant 0 : index
    %18 = vector.load %arg6[%c0_14, %c0_15] : memref<1x128xf32, #tpu.memory_space<vmem>>, vector<1x128xf32>
    %cst_16 = arith.constant dense<0.000000e+00> : vector<8x128xf32>
    %19 = tpu.matmul %16, %17, %cst_16 {dimension_numbers = #tpu.dot_dimension_numbers<[1], [0], [0], [1], [0, 0, 1, 1], [], []>} : vector<8x128xf32>, vector<128x128xf32>, vector<8x128xf32> -> vector<8x128xf32>
    %20 = vector.broadcast %18 : vector<1x128xf32> to vector<8x128xf32>
    %21 = arith.addf %19, %20 : vector<8x128xf32>
    %c0_17 = arith.constant 0 : index
    %c0_18 = arith.constant 0 : index
    %22 = vector.load %arg7[%c0_17, %c0_18] : memref<8x128xf32, #tpu.memory_space<vmem>>, vector<8x128xf32>
    tpu.vector_store %arg7[%c0_17, %c0_18], %21 {strides = array<i32>} : memref<8x128xf32, #tpu.memory_space<vmem>>, vector<8x128xf32>,
    return
  }
}

</mosaic_0001>

<llo_original>
// kernel: tpu_custom_call.1
$region0: #{tpu_custom_call.1}
  #allocation0 [shape = 'u32[]', space=smem, size = 0x4, offset = 0x4, fixed_abs, tag = 'smem constant byte address 0x4 - core index']
  #allocation1 [shape = 'u32[144,128]{1,0:T(1,128)}', space=vmem, size = 0x12000, scoped, tag = 'internal scratch']
  %s0 = inlined_call_operand.hbm [shape: f32[8,128], index: 0, kind: input, shape index: {}]
  %s1 = inlined_call_operand.hbm [shape: f32[128,128], index: 1, kind: input, shape index: {}]
  %s2 = inlined_call_operand.vmem [shape: f32[1,128], index: 2, kind: input, shape index: {}]
  %s3 = inlined_call_operand.hbm [shape: f32[128,128], index: 3, kind: input, shape index: {}]
  %s4 = inlined_call_operand.vmem [shape: f32[1,128], index: 4, kind: input, shape index: {}]
  %s5 = inlined_call_operand.hbm [shape: f32[128,128], index: 5, kind: input, shape index: {}]
  %s6 = inlined_call_operand.vmem [shape: f32[1,128], index: 6, kind: input, shape index: {}]
  %s7 = inlined_call_operand.hbm [shape: f32[8,128], index: 7, kind: output, shape index: {}]
  %s8 = sld [smem:[#allocation0]]
  $region54: #{tpu_custom_call.1} parent=0
    _
  %s10 = ssub.s32 1, %s8
  %s11 = scalar_select 0, %s10, %s8
  $region1: #{tpu_custom_call.1} parent=0
    #allocation2 [shape = 'u8[4096]{0}', space=vmem, size = 0x1000, scoped, tag = 'input window, operand 0, single buffered']
    #allocation3 [shape = 's32[1]{0}', space=sflag, size = 0x4, scoped, tag = 'scoped memory for tpu_custom_call.1']
    #allocation4 [shape = 's32[1]{0}', space=sflag, size = 0x4, scoped, tag = 'scoped memory for tpu_custom_call.1']
    #allocation5 [shape = 'u8[65536]{0}', space=vmem, size = 0x10000, scoped, tag = 'input window, operand 1, single buffered']
    #allocation6 [shape = 's32[1]{0}', space=sflag, size = 0x4, scoped, tag = 'scoped memory for tpu_custom_call.1']
    #allocation7 [shape = 'u8[65536]{0}', space=vmem, size = 0x10000, scoped, tag = 'input window, operand 3, single buffered']
    #allocation8 [shape = 'u8[65536]{0}', space=vmem, size = 0x10000, scoped, tag = 'input window, operand 5, single buffered']
    #allocation9 [shape = 's32[1]{0}', space=sflag, size = 0x4, scoped, tag = 'scoped memory for tpu_custom_call.1']
    #allocation10 [shape = 'u8[4096]{0}', space=vmem, size = 0x1000, scoped, tag = 'output window, operand 0, single buffered']
    %12 = vsyncpa [#allocation3], 0
    %13 = vsyncpa [#allocation6], 0
    %14 = vsyncpa [#allocation9], 0
    %15 = vsyncpa [#allocation4], 0
    // Predicated region
    $region2: #{tpu_custom_call.1} parent=1 // pred_check
      _
    $region3: #{tpu_custom_call.1} parent=1 // pred_check_branch
      %17 = sbr.rel (0) target = $region5
    $region4: #{tpu_custom_call.1} parent=1 // pred_region
      %s19 = ssub.s32 128, 128
      %20 = vsyncadd [#allocation3], %s19
      %s22 = sshll.u32 [#allocation2], 4
      %s23 = int_to_ptr.vmem [resolvable:$true] %s22
      %25 = dma.hbm_to_vmem [thread:$0]  %s0, 128, %s23, [#allocation3]
    $region5: #{tpu_custom_call.1} parent=1 // pred_fallthru
      _
    // Predicated region
    $region6: #{tpu_custom_call.1} parent=1 // pred_check
      _
    $region7: #{tpu_custom_call.1} parent=1 // pred_check_branch
      %27 = sbr.rel (0) target = $region9
    $region8: #{tpu_custom_call.1} parent=1 // pred_region
      %s29 = ssub.s32 2048, 2048
      %30 = vsyncadd [#allocation6], %s29
      %s31 = sshll.u32 [#allocation5], 4
      %s32 = int_to_ptr.vmem [resolvable:$true] %s31
      %37 = dma.hbm_to_vmem [thread:$0]  %s1, 2048, %s32, [#allocation6], 128, 128, 8
    $region9: #{tpu_custom_call.1} parent=1 // pred_fallthru
      _
    // Predicated region
    $region10: #{tpu_custom_call.1} parent=1 // pred_check
      _
    $region11: #{tpu_custom_call.1} parent=1 // pred_check_branch
      %39 = sbr.rel (0) target = $region13
    $region12: #{tpu_custom_call.1} parent=1 // pred_region
      _
    $region13: #{tpu_custom_call.1} parent=1 // pred_fallthru
      _
    // Predicated region
    $region14: #{tpu_custom_call.1} parent=1 // pred_check
      _
    $region15: #{tpu_custom_call.1} parent=1 // pred_check_branch
      %41 = sbr.rel (0) target = $region17
    $region16: #{tpu_custom_call.1} parent=1 // pred_region
      %s43 = ssub.s32 2048, 2048
      %44 = vsyncadd [#allocation6], %s43
      %s45 = sshll.u32 [#allocation7], 4
      %s46 = int_to_ptr.vmem [resolvable:$true] %s45
      %51 = dma.hbm_to_vmem [thread:$0]  %s3, 2048, %s46, [#allocation6], 128, 128, 8
    $region17: #{tpu_custom_call.1} parent=1 // pred_fallthru
      _
    // Predicated region
    $region18: #{tpu_custom_call.1} parent=1 // pred_check
      _
    $region19: #{tpu_custom_call.1} parent=1 // pred_check_branch
      %53 = sbr.rel (0) target = $region21
    $region20: #{tpu_custom_call.1} parent=1 // pred_region
      _
    $region21: #{tpu_custom_call.1} parent=1 // pred_fallthru
      _
    // Predicated region
    $region22: #{tpu_custom_call.1} parent=1 // pred_check
      _
    $region23: #{tpu_custom_call.1} parent=1 // pred_check_branch
      %55 = sbr.rel (0) target = $region25
    $region24: #{tpu_custom_call.1} parent=1 // pred_region
      %s57 = ssub.s32 2048, 2048
      %58 = vsyncadd [#allocation9], %s57
      %s59 = sshll.u32 [#allocation8], 4
      %s60 = int_to_ptr.vmem [resolvable:$true] %s59
      %65 = dma.hbm_to_vmem [thread:$0]  %s5, 2048, %s60, [#allocation9], 128, 128, 8
    $region25: #{tpu_custom_call.1} parent=1 // pred_fallthru
      _
    // Predicated region
    $region26: #{tpu_custom_call.1} parent=1 // pred_check
      _
    $region27: #{tpu_custom_call.1} parent=1 // pred_check_branch
      %67 = sbr.rel (0) target = $region29
    $region28: #{tpu_custom_call.1} parent=1 // pred_region
      _
    $region29: #{tpu_custom_call.1} parent=1 // pred_fallthru
      _
    // Predicated region
    $region30: #{tpu_custom_call.1} parent=1 // pred_check
      _
    $region31: #{tpu_custom_call.1} parent=1 // pred_check_branch
      %69 = sbr.rel (0) target = $region33
    $region32: #{tpu_custom_call.1} parent=1 // pred_region
      %70 = dma.done [#allocation3], 128
    $region33: #{tpu_custom_call.1} parent=1 // pred_fallthru
      _
    // Predicated region
    $region34: #{tpu_custom_call.1} parent=1 // pred_check
      _
    $region35: #{tpu_custom_call.1} parent=1 // pred_check_branch
      %72 = sbr.rel (0) target = $region37
    $region36: #{tpu_custom_call.1} parent=1 // pred_region
      %73 = dma.done [#allocation6], 2048
    $region37: #{tpu_custom_call.1} parent=1 // pred_fallthru
      _
    // Predicated region
    $region38: #{tpu_custom_call.1} parent=1 // pred_check
      _
    $region39: #{tpu_custom_call.1} parent=1 // pred_check_branch
      %75 = sbr.rel (0) target = $region41
    $region40: #{tpu_custom_call.1} parent=1 // pred_region
      %76 = dma.done [#allocation6], 2048
    $region41: #{tpu_custom_call.1} parent=1 // pred_fallthru
      _
    // Predicated region
    $region42: #{tpu_custom_call.1} parent=1 // pred_check
      _
    $region43: #{tpu_custom_call.1} parent=1 // pred_check_branch
      %78 = sbr.rel (0) target = $region45
    $region44: #{tpu_custom_call.1} parent=1 // pred_region
      %79 = dma.done [#allocation9], 2048
    $region45: #{tpu_custom_call.1} parent=1 // pred_fallthru
      _
    %v80 = vld [vmem:[#allocation2] sm:$0xff]
    %v81 = vld [vmem:[#allocation5] sm:$0xff]
    %v82 = vld [vmem:[#allocation5 + $0x8] sm:$0xff]
    %v83 = vld [vmem:[#allocation5 + $0x10] sm:$0xff]
    %v84 = vld [vmem:[#allocation5 + $0x18] sm:$0xff]
    %v85 = vld [vmem:[#allocation5 + $0x20] sm:$0xff]
    %v86 = vld [vmem:[#allocation5 + $0x28] sm:$0xff]
    %v87 = vld [vmem:[#allocation5 + $0x30] sm:$0xff]
    %v88 = vld [vmem:[#allocation5 + $0x38] sm:$0xff]
    %v89 = vld [vmem:[#allocation5 + $0x40] sm:$0xff]
    %v90 = vld [vmem:[#allocation5 + $0x48] sm:$0xff]
    %v91 = vld [vmem:[#allocation5 + $0x50] sm:$0xff]
    %v92 = vld [vmem:[#allocation5 + $0x58] sm:$0xff]
    %v93 = vld [vmem:[#allocation5 + $0x60] sm:$0xff]
    %v94 = vld [vmem:[#allocation5 + $0x68] sm:$0xff]
    %v95 = vld [vmem:[#allocation5 + $0x70] sm:$0xff]
    %v96 = vld [vmem:[#allocation5 + $0x78] sm:$0xff]
    %v97 = vld [vmem:[%s2] sm:$0x1]
    %v99 = vlaneseq
    %v100 = vshrl.u32 %v99, 7
    %v101 = vsub.s32 0, %v100
    %v102 = vrot.slane %v97, %v101
    %104 = vmatprep.subr.mxu0 0.0
    %105 = vmatpush1.msra.mxu0 %v81
    %106 = vmatprep.subr.mxu0 0.0
    %107 = vmatpush1.msra.mxu0 %v82
    %108 = vmatprep.subr.mxu0 0.0
    %109 = vmatpush1.msra.mxu0 %v83
    %110 = vmatprep.subr.mxu0 0.0
    %111 = vmatpush1.msra.mxu0 %v84
    %112 = vmatprep.subr.mxu0 0.0
    %113 = vmatpush1.msra.mxu0 %v85
    %114 = vmatprep.subr.mxu0 0.0
    %115 = vmatpush1.msra.mxu0 %v86
    %116 = vmatprep.subr.mxu0 0.0
    %117 = vmatpush1.msra.mxu0 %v87
    %118 = vmatprep.subr.mxu0 0.0
    %119 = vmatpush1.msra.mxu0 %v88
    %120 = vmatprep.subr.mxu0 0.0
    %121 = vmatpush1.msra.mxu0 %v89
    %122 = vmatprep.subr.mxu0 0.0
    %123 = vmatpush1.msra.mxu0 %v90
    %124 = vmatprep.subr.mxu0 0.0
    %125 = vmatpush1.msra.mxu0 %v91
    %126 = vmatprep.subr.mxu0 0.0
    %127 = vmatpush1.msra.mxu0 %v92
    %128 = vmatprep.subr.mxu0 0.0
    %129 = vmatpush1.msra.mxu0 %v93
    %130 = vmatprep.subr.mxu0 0.0
    %131 = vmatpush1.msra.mxu0 %v94
    %132 = vmatprep.subr.mxu0 0.0
    %133 = vmatpush1.msra.mxu0 %v95
    %134 = vmatprep.subr.mxu0 0.0
    %135 = vmatpush1.msra.mxu0 %v96
    %136 = vmatprep.subr.mxu0 0.0
    %137 = vmatpush1.msra.mxu0 0.0
    %138 = vmatprep.subr.mxu0 0.0
    %139 = vmatpush1.msra.mxu0 0.0
    %140 = vmatprep.subr.mxu0 0.0
    %141 = vmatpush1.msra.mxu0 0.0
    %142 = vmatprep.subr.mxu0 0.0
    %143 = vmatpush1.msra.mxu0 0.0
    %144 = vmatprep.subr.mxu0 0.0
    %145 = vmatpush1.msra.mxu0 0.0
    %146 = vmatprep.subr.mxu0 0.0
    %147 = vmatpush1.msra.mxu0 0.0
    %148 = vmatprep.subr.mxu0 0.0
    %149 = vmatpush1.msra.mxu0 0.0
    %150 = vmatprep.subr.mxu0 0.0
    %151 = vmatpush1.msra.mxu0 0.0
    %152 = vmatprep.subr.mxu0 0.0
    %153 = vmatpush1.msra.mxu0 0.0
    %154 = vmatprep.subr.mxu0 0.0
    %155 = vmatpush1.msra.mxu0 0.0
    %156 = vmatprep.subr.mxu0 0.0
    %157 = vmatpush1.msra.mxu0 0.0
    %158 = vmatprep.subr.mxu0 0.0
    %159 = vmatpush1.msra.mxu0 0.0
    %160 = vmatprep.subr.mxu0 0.0
    %161 = vmatpush1.msra.mxu0 0.0
    %162 = vmatprep.subr.mxu0 0.0
    %163 = vmatpush1.msra.mxu0 0.0
    %164 = vmatprep.subr.mxu0 0.0
    %165 = vmatpush1.msra.mxu0 0.0
    %166 = vmatprep.subr.mxu0 0.0
    %167 = vmatpush1.msra.mxu0 0.0
    %168 = vmatprep.mubr.f32.mxu0 0.0
    %169 = vmatmul.mubr.f32.gmra.mrb[0].mxu0 %v80
    %v170 = vpop.f32.mrb[0].mxu0
    %v171 = vadd.f32 %v102, %v170
    %v172 = vpop.f32.mrb[0].mxu0
    %173 = vdwg.mxu0
    %v174 = vmul.f32 %v171, 0.01
    %v175 = vmax.f32 %v171, %v174
    %v176 = vld [vmem:[#allocation7] sm:$0xff]
    %v177 = vld [vmem:[#allocation7 + $0x8] sm:$0xff]
    %v178 = vld [vmem:[#allocation7 + $0x10] sm:$0xff]
    %v179 = vld [vmem:[#allocation7 + $0x18] sm:$0xff]
    %v180 = vld [vmem:[#allocation7 + $0x20] sm:$0xff]
    %v181 = vld [vmem:[#allocation7 + $0x28] sm:$0xff]
    %v182 = vld [vmem:[#allocation7 + $0x30] sm:$0xff]
    %v183 = vld [vmem:[#allocation7 + $0x38] sm:$0xff]
    %v184 = vld [vmem:[#allocation7 + $0x40] sm:$0xff]
    %v185 = vld [vmem:[#allocation7 + $0x48] sm:$0xff]
    %v186 = vld [vmem:[#allocation7 + $0x50] sm:$0xff]
    %v187 = vld [vmem:[#allocation7 + $0x58] sm:$0xff]
    %v188 = vld [vmem:[#allocation7 + $0x60] sm:$0xff]
    %v189 = vld [vmem:[#allocation7 + $0x68] sm:$0xff]
    %v190 = vld [vmem:[#allocation7 + $0x70] sm:$0xff]
    %v191 = vld [vmem:[#allocation7 + $0x78] sm:$0xff]
    %v192 = vld [vmem:[%s4] sm:$0x1]
    %v194 = vlaneseq
    %v195 = vshrl.u32 %v194, 7
    %v196 = vsub.s32 0, %v195
    %v197 = vrot.slane %v192, %v196
    %199 = vmatprep.subr.mxu0 0.0
    %200 = vmatpush1.msra.mxu0 %v176
    %201 = vmatprep.subr.mxu0 0.0
    %202 = vmatpush1.msra.mxu0 %v177
    %203 = vmatprep.subr.mxu0 0.0
    %204 = vmatpush1.msra.mxu0 %v178
    %205 = vmatprep.subr.mxu0 0.0
    %206 = vmatpush1.msra.mxu0 %v179
    %207 = vmatprep.subr.mxu0 0.0
    %208 = vmatpush1.msra.mxu0 %v180
    %209 = vmatprep.subr.mxu0 0.0
    %210 = vmatpush1.msra.mxu0 %v181
    %211 = vmatprep.subr.mxu0 0.0
    %212 = vmatpush1.msra.mxu0 %v182
    %213 = vmatprep.subr.mxu0 0.0
    %214 = vmatpush1.msra.mxu0 %v183
    %215 = vmatprep.subr.mxu0 0.0
    %216 = vmatpush1.msra.mxu0 %v184
    %217 = vmatprep.subr.mxu0 0.0
    %218 = vmatpush1.msra.mxu0 %v185
    %219 = vmatprep.subr.mxu0 0.0
    %220 = vmatpush1.msra.mxu0 %v186
    %221 = vmatprep.subr.mxu0 0.0
    %222 = vmatpush1.msra.mxu0 %v187
    %223 = vmatprep.subr.mxu0 0.0
    %224 = vmatpush1.msra.mxu0 %v188
    %225 = vmatprep.subr.mxu0 0.0
    %226 = vmatpush1.msra.mxu0 %v189
    %227 = vmatprep.subr.mxu0 0.0
    %228 = vmatpush1.msra.mxu0 %v190
    %229 = vmatprep.subr.mxu0 0.0
    %230 = vmatpush1.msra.mxu0 %v191
    %231 = vmatprep.subr.mxu0 0.0
    %232 = vmatpush1.msra.mxu0 0.0
    %233 = vmatprep.subr.mxu0 0.0
    %234 = vmatpush1.msra.mxu0 0.0
    %235 = vmatprep.subr.mxu0 0.0
    %236 = vmatpush1.msra.mxu0 0.0
    %237 = vmatprep.subr.mxu0 0.0
    %238 = vmatpush1.msra.mxu0 0.0
    %239 = vmatprep.subr.mxu0 0.0
    %240 = vmatpush1.msra.mxu0 0.0
    %241 = vmatprep.subr.mxu0 0.0
    %242 = vmatpush1.msra.mxu0 0.0
    %243 = vmatprep.subr.mxu0 0.0
    %244 = vmatpush1.msra.mxu0 0.0
    %245 = vmatprep.subr.mxu0 0.0
    %246 = vmatpush1.msra.mxu0 0.0
    %247 = vmatprep.subr.mxu0 0.0
    %248 = vmatpush1.msra.mxu0 0.0
    %249 = vmatprep.subr.mxu0 0.0
    %250 = vmatpush1.msra.mxu0 0.0
    %251 = vmatprep.subr.mxu0 0.0
    %252 = vmatpush1.msra.mxu0 0.0
    %253 = vmatprep.subr.mxu0 0.0
    %254 = vmatpush1.msra.mxu0 0.0
    %255 = vmatprep.subr.mxu0 0.0
    %256 = vmatpush1.msra.mxu0 0.0
    %257 = vmatprep.subr.mxu0 0.0
    %258 = vmatpush1.msra.mxu0 0.0
    %259 = vmatprep.subr.mxu0 0.0
    %260 = vmatpush1.msra.mxu0 0.0
    %261 = vmatprep.subr.mxu0 0.0
    %262 = vmatpush1.msra.mxu0 0.0
    %263 = vmatprep.mubr.f32.mxu0 0.0
    %264 = vmatmul.mubr.f32.gmra.mrb[0].mxu0 %v175
    %v265 = vpop.f32.mrb[0].mxu0
    %v266 = vadd.f32 %v197, %v265
    %v267 = vpop.f32.mrb[0].mxu0
    %268 = vdwg.mxu0
    %v269 = vmul.f32 %v266, 0.01
    %v270 = vmax.f32 %v266, %v269
    %v271 = vld [vmem:[#allocation8] sm:$0xff]
    %v272 = vld [vmem:[#allocation8 + $0x8] sm:$0xff]
    %v273 = vld [vmem:[#allocation8 + $0x10] sm:$0xff]
    %v274 = vld [vmem:[#allocation8 + $0x18] sm:$0xff]
    %v275 = vld [vmem:[#allocation8 + $0x20] sm:$0xff]
    %v276 = vld [vmem:[#allocation8 + $0x28] sm:$0xff]
    %v277 = vld [vmem:[#allocation8 + $0x30] sm:$0xff]
    %v278 = vld [vmem:[#allocation8 + $0x38] sm:$0xff]
    %v279 = vld [vmem:[#allocation8 + $0x40] sm:$0xff]
    %v280 = vld [vmem:[#allocation8 + $0x48] sm:$0xff]
    %v281 = vld [vmem:[#allocation8 + $0x50] sm:$0xff]
    %v282 = vld [vmem:[#allocation8 + $0x58] sm:$0xff]
    %v283 = vld [vmem:[#allocation8 + $0x60] sm:$0xff]
    %v284 = vld [vmem:[#allocation8 + $0x68] sm:$0xff]
    %v285 = vld [vmem:[#allocation8 + $0x70] sm:$0xff]
    %v286 = vld [vmem:[#allocation8 + $0x78] sm:$0xff]
    %v287 = vld [vmem:[%s6] sm:$0x1]
    %v289 = vlaneseq
    %v290 = vshrl.u32 %v289, 7
    %v291 = vsub.s32 0, %v290
    %v292 = vrot.slane %v287, %v291
    %294 = vmatprep.subr.mxu0 0.0
    %295 = vmatpush1.msra.mxu0 %v271
    %296 = vmatprep.subr.mxu0 0.0
    %297 = vmatpush1.msra.mxu0 %v272
    %298 = vmatprep.subr.mxu0 0.0
    %299 = vmatpush1.msra.mxu0 %v273
    %300 = vmatprep.subr.mxu0 0.0
    %301 = vmatpush1.msra.mxu0 %v274
    %302 = vmatprep.subr.mxu0 0.0
    %303 = vmatpush1.msra.mxu0 %v275
    %304 = vmatprep.subr.mxu0 0.0
    %305 = vmatpush1.msra.mxu0 %v276
    %306 = vmatprep.subr.mxu0 0.0
    %307 = vmatpush1.msra.mxu0 %v277
    %308 = vmatprep.subr.mxu0 0.0
    %309 = vmatpush1.msra.mxu0 %v278
    %310 = vmatprep.subr.mxu0 0.0
    %311 = vmatpush1.msra.mxu0 %v279
    %312 = vmatprep.subr.mxu0 0.0
    %313 = vmatpush1.msra.mxu0 %v280
    %314 = vmatprep.subr.mxu0 0.0
    %315 = vmatpush1.msra.mxu0 %v281
    %316 = vmatprep.subr.mxu0 0.0
    %317 = vmatpush1.msra.mxu0 %v282
    %318 = vmatprep.subr.mxu0 0.0
    %319 = vmatpush1.msra.mxu0 %v283
    %320 = vmatprep.subr.mxu0 0.0
    %321 = vmatpush1.msra.mxu0 %v284
    %322 = vmatprep.subr.mxu0 0.0
    %323 = vmatpush1.msra.mxu0 %v285
    %324 = vmatprep.subr.mxu0 0.0
    %325 = vmatpush1.msra.mxu0 %v286
    %326 = vmatprep.subr.mxu0 0.0
    %327 = vmatpush1.msra.mxu0 0.0
    %328 = vmatprep.subr.mxu0 0.0
    %329 = vmatpush1.msra.mxu0 0.0
    %330 = vmatprep.subr.mxu0 0.0
    %331 = vmatpush1.msra.mxu0 0.0
    %332 = vmatprep.subr.mxu0 0.0
    %333 = vmatpush1.msra.mxu0 0.0
    %334 = vmatprep.subr.mxu0 0.0
    %335 = vmatpush1.msra.mxu0 0.0
    %336 = vmatprep.subr.mxu0 0.0
    %337 = vmatpush1.msra.mxu0 0.0
    %338 = vmatprep.subr.mxu0 0.0
    %339 = vmatpush1.msra.mxu0 0.0
    %340 = vmatprep.subr.mxu0 0.0
    %341 = vmatpush1.msra.mxu0 0.0
    %342 = vmatprep.subr.mxu0 0.0
    %343 = vmatpush1.msra.mxu0 0.0
    %344 = vmatprep.subr.mxu0 0.0
    %345 = vmatpush1.msra.mxu0 0.0
    %346 = vmatprep.subr.mxu0 0.0
    %347 = vmatpush1.msra.mxu0 0.0
    %348 = vmatprep.subr.mxu0 0.0
    %349 = vmatpush1.msra.mxu0 0.0
    %350 = vmatprep.subr.mxu0 0.0
    %351 = vmatpush1.msra.mxu0 0.0
    %352 = vmatprep.subr.mxu0 0.0
    %353 = vmatpush1.msra.mxu0 0.0
    %354 = vmatprep.subr.mxu0 0.0
    %355 = vmatpush1.msra.mxu0 0.0
    %356 = vmatprep.subr.mxu0 0.0
    %357 = vmatpush1.msra.mxu0 0.0
    %358 = vmatprep.mubr.f32.mxu0 0.0
    %359 = vmatmul.mubr.f32.gmra.mrb[0].mxu0 %v270
    %v360 = vpop.f32.mrb[0].mxu0
    %v361 = vadd.f32 %v292, %v360
    %v362 = vpop.f32.mrb[0].mxu0
    %363 = vdwg.mxu0
    %364 = vst [vmem:[#allocation10] sm:$0xff] %v361
    // Predicated region
    $region46: #{tpu_custom_call.1} parent=1 // pred_check
      _
    $region47: #{tpu_custom_call.1} parent=1 // pred_check_branch
      %366 = sbr.rel (0) target = $region49
    $region48: #{tpu_custom_call.1} parent=1 // pred_region
      %s368 = ssub.s32 128, 128
      %369 = vsyncadd [#allocation4], %s368
      %s371 = sshll.u32 [#allocation10], 4
      %s372 = int_to_ptr.vmem [resolvable:$true] %s371
      %374 = dma.vmem_to_hbm [thread:$0]  %s372, 128, %s7, [#allocation4]
    $region49: #{tpu_custom_call.1} parent=1 // pred_fallthru
      _
    // Predicated region
    $region50: #{tpu_custom_call.1} parent=1 // pred_check
      _
    $region51: #{tpu_custom_call.1} parent=1 // pred_check_branch
      %376 = sbr.rel (0) target = $region53
    $region52: #{tpu_custom_call.1} parent=1 // pred_region
      %377 = dma.done [#allocation4], 128
    $region53: #{tpu_custom_call.1} parent=1 // pred_fallthru
      _
    %378 = vsyncpa [#allocation3], 1
    %379 = vsyncpa [#allocation6], 1
    %380 = vsyncpa [#allocation9], 1
    %381 = vsyncpa [#allocation4], 1

</llo_original>
